<compile_context>
chip_gen: v7x
topology: tpu7x:2x2x1
jax: 0.10.0
libtpu: 0.0.40
codegen_flags: <defaults>
</compile_context>

<pallas_src>
import math
import functools
import jax
import jax.numpy as jnp
from jax.experimental import pallas as pl
from jax.experimental.pallas import tpu as pltpu

HIDDEN = 128
LANE = 128


def _round_up(n, m):
    return ((n + m - 1) // m) * m


def _cdiv(n, m):
    return (n + m - 1) // m


# ----------------------------------------------------------------------------
# Kernels
# ----------------------------------------------------------------------------
def _mlp_q(x_ref, w1_ref, b1_ref, w2_ref, b2_ref, w3_ref, b3_ref, precision):
    """Shared 3-layer MLP body: MXU dots with f32 accumulation, f32 bias+ReLU
    on the VPU (v5e-safe: no bf16 VPU there), activations cast back to the
    compute dtype before the next dot. Returns f32 Q of shape (tile_b, n_out)."""
    cdt = x_ref.dtype
    h = jnp.dot(x_ref[...], w1_ref[...],
                preferred_element_type=jnp.float32, precision=precision)
    h = jnp.maximum(h + b1_ref[...], 0.0).astype(cdt)
    h = jnp.dot(h, w2_ref[...],
                preferred_element_type=jnp.float32, precision=precision)
    h = jnp.maximum(h + b2_ref[...], 0.0).astype(cdt)
    q = jnp.dot(h, w3_ref[...],
                preferred_element_type=jnp.float32, precision=precision)
    return q + b3_ref[...]


def dqn_kernel(x_ref, w1_ref, b1_ref, w2_ref, b2_ref, w3_ref, b3_ref, o_ref,
               *, precision=None):
    """Q-value kernel: lane-dense (tile_b, 128) output block, stored in
    o_ref.dtype (bf16 when compute dtype is bf16 -> halves HBM writeback)."""
    q = _mlp_q(x_ref, w1_ref, b1_ref, w2_ref, b2_ref, w3_ref, b3_ref, precision)
    o_ref[...] = q.astype(o_ref.dtype)


def dqn_argmax_kernel(x_ref, w1_ref, b1_ref, w2_ref, b2_ref, w3_ref, b3_ref,
                      a_ref, *, action_space, precision=None):
    """Acting-path kernel: fused argmax over the valid action columns.
    Emits (tile_b, 1) int32 -> ~128x less writeback than the padded f32 slab."""
    q = _mlp_q(x_ref, w1_ref, b1_ref, w2_ref, b2_ref, w3_ref, b3_ref, precision)
    n_out = q.shape[-1]
    col = jax.lax.broadcasted_iota(jnp.int32, q.shape, dimension=1)
    qm = jnp.where(col < action_space, q, -jnp.inf)          # mask padded cols
    qmax = jnp.max(qm, axis=-1, keepdims=True)
    # first-max index via min over matching columns (max/min reductions only)
    idx = jnp.where(qm == qmax, col, n_out)
    a_ref[...] = jnp.min(idx, axis=-1, keepdims=True).astype(jnp.int32)


# ----------------------------------------------------------------------------
# Host-side wrappers
# ----------------------------------------------------------------------------
def prepare_params(params, compute_dtype=jnp.float32):
    """One-time parameter prep (hoisted out of the forward path):
    pad layer-3 to a lane-dense 128-wide output and cast weights to the MXU
    compute dtype; biases stay f32 (VPU path)."""
    w1, b1, w2, b2, w3, b3 = params
    hidden = w1.shape[1]
    action_space = w3.shape[1]
    n_out = _round_up(max(action_space, LANE), LANE)
    w3p = jnp.zeros((hidden, n_out), w3.dtype).at[:, :action_space].set(w3)
    b3p = jnp.zeros((1, n_out), b3.dtype).at[:, :action_space].set(b3)
    w1c, w2c, w3c = (w.astype(compute_dtype) for w in (w1, w2, w3p))
    b1f, b2f, b3f = (b.astype(jnp.float32) for b in (b1, b2, b3p))
    return (w1c, b1f, w2c, b2f, w3c, b3f)


def _plan_batch(B, tile_b, min_row):
    """Pick (tile, padded_B, steps): tile is a multiple of min_row, and the grid
    has >= 2 steps whenever the padded batch allows it (keeps both v7x TCs busy)."""
    tile_req = _round_up(max(min_row, tile_b), min_row)
    Bp0 = _round_up(B, min_row)
    steps = max(2, _cdiv(Bp0, tile_req)) if Bp0 >= 2 * min_row else 1
    tile = _round_up(_cdiv(Bp0, steps), min_row)
    return tile, tile * steps, steps


def _run(kernel, x, prepped, out_cols, out_dtype, tile_b):
    """Shared pallas_call builder for the Q-value and argmax kernels."""
    w1c, b1f, w2c, b2f, w3c, b3f = prepped
    compute_dtype = w1c.dtype
    B, obs = x.shape
    hidden = w1c.shape[1]
    n_out = w3c.shape[1]

    # Batch tiling: sublane multiple depends on compute dtype (bf16 -> 16 rows).
    min_row = max(8, 32 // jnp.dtype(compute_dtype).itemsize)
    tile, Bp, steps = _plan_batch(B, tile_b, min_row)

    xc = x.astype(compute_dtype)
    if Bp != B:
        xc = jnp.pad(xc, ((0, Bp - B), (0, 0)))

    # Weights/biases: same block index every grid step -> stay VMEM-resident.
    resident = lambda a: pl.BlockSpec(a.shape, lambda i: (0, 0))

    itemsize = jnp.dtype(compute_dtype).itemsize
    flops = 2 * Bp * (obs * hidden + hidden * hidden + hidden * n_out)
    bytes_accessed = (
        Bp * obs * itemsize                                        # x
        + (obs * hidden + hidden * hidden + hidden * n_out) * itemsize  # weights
        + (2 * hidden + n_out) * 4                                 # f32 biases
        + Bp * out_cols * jnp.dtype(out_dtype).itemsize            # output
    )

    return pl.pallas_call(
        kernel,
        out_shape=jax.ShapeDtypeStruct((Bp, out_cols), out_dtype),
        grid=(steps,),
        in_specs=[
            pl.BlockSpec((tile, obs), lambda i: (i, 0)),  # x: batch-tiled
            resident(w1c), resident(b1f),
            resident(w2c), resident(b2f),
            resident(w3c), resident(b3f),
        ],
        out_specs=pl.BlockSpec((tile, out_cols), lambda i: (i, 0)),
        compiler_params=pltpu.CompilerParams(
            dimension_semantics=("parallel",),  # megacore split on v7x
        ),
        cost_estimate=pl.CostEstimate(
            flops=flops, transcendentals=0, bytes_accessed=bytes_accessed),
    )(xc, w1c, b1f, w2c, b2f, w3c, b3f)


@functools.partial(jax.jit,
                   static_argnames=("action_space", "tile_b", "out_dtype",
                                    "precision"))
def dqn_forward(x, prepped, *, action_space, tile_b=1024, out_dtype=None,
                precision=None):
    """Q-values, shape (B, action_space). Output dtype defaults to the compute
    dtype (bf16 params -> bf16 writeback; upcast in JAX if needed).
    Pass precision=jax.lax.Precision.HIGHEST for strict f32 matmul parity."""
    compute_dtype = prepped[0].dtype
    out_dtype = compute_dtype if out_dtype is None else out_dtype
    n_out = prepped[4].shape[1]
    kern = functools.partial(dqn_kernel, precision=precision)
    out = _run(kern, x, prepped, n_out, out_dtype, tile_b)
    return out[:x.shape[0], :action_space]


@functools.partial(jax.jit,
                   static_argnames=("action_space", "tile_b", "precision"))
def dqn_select_action(x, prepped, *, action_space, tile_b=1024, precision=None):
    """Greedy actions, shape (B,) int32 — fused argmax, tiny writeback."""
    kern = functools.partial(dqn_argmax_kernel, action_space=action_space,
                             precision=precision)
    out = _run(kern, x, prepped, 1, jnp.int32, tile_b)
    return out[:x.shape[0], 0]


# ----------------------------------------------------------------------------
# Parameter init (mimics PyTorch nn.Linear defaults)
# ----------------------------------------------------------------------------
def init_linear(key, fan_in, fan_out):
    kw, kb = jax.random.split(key)
    bound = 1.0 / math.sqrt(fan_in)
    w = jax.random.uniform(kw, (fan_in, fan_out), jnp.float32, -bound, bound)
    b = jax.random.uniform(kb, (1, fan_out), jnp.float32, -bound, bound)
    return w, b


def make_params(key, obs_space, action_space, hidden=HIDDEN):
    k1, k2, k3 = jax.random.split(key, 3)
    w1, b1 = init_linear(k1, obs_space, hidden)
    w2, b2 = init_linear(k2, hidden, hidden)
    w3, b3 = init_linear(k3, hidden, action_space)
    return (w1, b1, w2, b2, w3, b3)


if __name__ == "__main__":
    key = jax.random.PRNGKey(0)
    k_params, k_x, k_x2 = jax.random.split(key, 3)

    batch = 8
    obs_space = 16
    action_space = 4

    params = make_params(k_params, obs_space, action_space)
    x = jax.random.normal(k_x, (batch, obs_space), jnp.float32)

    # Reference in plain JAX (same math as the PyTorch module).
    w1, b1, w2, b2, w3, b3 = params
    ref = jnp.maximum(x @ w1 + b1, 0.0)
    ref = jnp.maximum(ref @ w2 + b2, 0.0)
    ref = ref @ w3 + b3

    # --- f32 path (params prepared once, reused for every forward) ---
    prep_f32 = prepare_params(params, jnp.float32)
    out = dqn_forward(x, prep_f32, action_space=action_space)
    jax.block_until_ready(out)
    assert out.shape == (batch, action_space)
    assert jnp.allclose(out, ref, atol=1e-5, rtol=1e-5)

    # --- bf16-fed MXU path (f32 accumulation, bf16 writeback) ---
    prep_bf16 = prepare_params(params, jnp.bfloat16)
    out_bf16 = dqn_forward(x, prep_bf16, action_space=action_space)
    jax.block_until_ready(out_bf16)
    assert out_bf16.shape == (batch, action_space)
    assert jnp.allclose(out_bf16.astype(jnp.float32), ref, atol=5e-2, rtol=5e-2)

    # --- fused-argmax acting path ---
    act = dqn_select_action(x, prep_f32, action_space=action_space)
    jax.block_until_ready(act)
    assert act.shape == (batch,)
    assert jnp.array_equal(act, jnp.argmax(out, axis=-1))

    # --- larger batch: multi-step grid (>= 2 tiles, both v7x TCs busy) ---
    B2 = 2048
    x2 = jax.random.normal(k_x2, (B2, obs_space), jnp.float32)
    ref2 = jnp.maximum(x2 @ w1 + b1, 0.0)
    ref2 = jnp.maximum(ref2 @ w2 + b2, 0.0)
    ref2 = ref2 @ w3 + b3
    out2 = dqn_forward(x2, prep_f32, action_space=action_space, tile_b=1024)
    jax.block_until_ready(out2)
    assert out2.shape == (B2, action_space)
    assert jnp.allclose(out2, ref2, atol=1e-4, rtol=1e-4)

    print("KERNEL_OK")
</pallas_src>

<mosaic_0001>
module attributes {stable_mosaic.version = 11 : i64} {
  func.func @dqn_kernel(%arg0: i32, %arg1: memref<8x16xf32, #tpu.memory_space<vmem>>, %arg2: memref<16x128xf32, #tpu.memory_space<vmem>>, %arg3: memref<1x128xf32, #tpu.memory_space<vmem>>, %arg4: memref<128x128xf32, #tpu.memory_space<vmem>>, %arg5: memref<1x128xf32, #tpu.memory_space<vmem>>, %arg6: memref<128x128xf32, #tpu.memory_space<vmem>>, %arg7: memref<1x128xf32, #tpu.memory_space<vmem>>, %arg8: memref<8x128xf32, #tpu.memory_space<vmem>>) attributes {dimension_semantics = [#tpu.dimension_semantics<parallel>], iteration_bounds = array<i64: 1>, scalar_prefetch = 0 : i64, scratch_operands = 0 : i64, tpu.core_type = #tpu.core_type<tc>, window_params = [{transform_indices = @transform_0, window_bounds = array<i64: 8, 16>}, {pipeline_mode = #tpu.pipeline_mode<synchronous>, transform_indices = @transform_1, window_bounds = array<i64: 16, 128>}, {pipeline_mode = #tpu.pipeline_mode<synchronous>, transform_indices = @transform_2, window_bounds = array<i64: 1, 128>}, {pipeline_mode = #tpu.pipeline_mode<synchronous>, transform_indices = @transform_3, window_bounds = array<i64: 128, 128>}, {pipeline_mode = #tpu.pipeline_mode<synchronous>, transform_indices = @transform_4, window_bounds = array<i64: 1, 128>}, {pipeline_mode = #tpu.pipeline_mode<synchronous>, transform_indices = @transform_5, window_bounds = array<i64: 128, 128>}, {pipeline_mode = #tpu.pipeline_mode<synchronous>, transform_indices = @transform_6, window_bounds = array<i64: 1, 128>}, {transform_indices = @transform_7, window_bounds = array<i64: 8, 128>}]} {
    %c0 = arith.constant 0 : index
    %c0_0 = arith.constant 0 : index
    %0 = vector.load %arg1[%c0, %c0_0] : memref<8x16xf32, #tpu.memory_space<vmem>>, vector<8x16xf32>
    %c0_1 = arith.constant 0 : index
    %c0_2 = arith.constant 0 : index
    %1 = vector.load %arg2[%c0_1, %c0_2] : memref<16x128xf32, #tpu.memory_space<vmem>>, vector<16x128xf32>
    %cst = arith.constant dense<0.000000e+00> : vector<8x128xf32>
    %2 = tpu.matmul %0, %1, %cst {dimension_numbers = #tpu.dot_dimension_numbers<[1], [0], [0], [1], [0, 0, 1, 1], [], []>} : vector<8x16xf32>, vector<16x128xf32>, vector<8x128xf32> -> vector<8x128xf32>
    %c0_3 = arith.constant 0 : index
    %c0_4 = arith.constant 0 : index
    %3 = vector.load %arg3[%c0_3, %c0_4] : memref<1x128xf32, #tpu.memory_space<vmem>>, vector<1x128xf32>
    %4 = vector.broadcast %3 : vector<1x128xf32> to vector<8x128xf32>
    %5 = arith.addf %2, %4 : vector<8x128xf32>
    %cst_5 = arith.constant 0.000000e+00 : f32
    %6 = vector.broadcast %cst_5 : f32 to vector<8x128xf32>
    %7 = arith.maximumf %5, %6 : vector<8x128xf32>
    %c0_6 = arith.constant 0 : index
    %c0_7 = arith.constant 0 : index
    %8 = vector.load %arg4[%c0_6, %c0_7] : memref<128x128xf32, #tpu.memory_space<vmem>>, vector<128x128xf32>
    %cst_8 = arith.constant dense<0.000000e+00> : vector<8x128xf32>
    %9 = tpu.matmul %7, %8, %cst_8 {dimension_numbers = #tpu.dot_dimension_numbers<[1], [0], [0], [1], [0, 0, 1, 1], [], []>} : vector<8x128xf32>, vector<128x128xf32>, vector<8x128xf32> -> vector<8x128xf32>
    %c0_9 = arith.constant 0 : index
    %c0_10 = arith.constant 0 : index
    %10 = vector.load %arg5[%c0_9, %c0_10] : memref<1x128xf32, #tpu.memory_space<vmem>>, vector<1x128xf32>
    %11 = vector.broadcast %10 : vector<1x128xf32> to vector<8x128xf32>
    %12 = arith.addf %9, %11 : vector<8x128xf32>
    %cst_11 = arith.constant 0.000000e+00 : f32
    %13 = vector.broadcast %cst_11 : f32 to vector<8x128xf32>
    %14 = arith.maximumf %12, %13 : vector<8x128xf32>
    %c0_12 = arith.constant 0 : index
    %c0_13 = arith.constant 0 : index
    %15 = vector.load %arg6[%c0_12, %c0_13] : memref<128x128xf32, #tpu.memory_space<vmem>>, vector<128x128xf32>
    %cst_14 = arith.constant dense<0.000000e+00> : vector<8x128xf32>
    %16 = tpu.matmul %14, %15, %cst_14 {dimension_numbers = #tpu.dot_dimension_numbers<[1], [0], [0], [1], [0, 0, 1, 1], [], []>} : vector<8x128xf32>, vector<128x128xf32>, vector<8x128xf32> -> vector<8x128xf32>
    %c0_15 = arith.constant 0 : index
    %c0_16 = arith.constant 0 : index
    %17 = vector.load %arg7[%c0_15, %c0_16] : memref<1x128xf32, #tpu.memory_space<vmem>>, vector<1x128xf32>
    %18 = vector.broadcast %17 : vector<1x128xf32> to vector<8x128xf32>
    %19 = arith.addf %16, %18 : vector<8x128xf32>
    %c0_17 = arith.constant 0 : index
    %c0_18 = arith.constant 0 : index
    %20 = vector.load %arg8[%c0_17, %c0_18] : memref<8x128xf32, #tpu.memory_space<vmem>>, vector<8x128xf32>
    tpu.vector_store %arg8[%c0_17, %c0_18], %19 {strides = array<i32>} : memref<8x128xf32, #tpu.memory_space<vmem>>, vector<8x128xf32>,
    return
  }
  func.func @transform_0(%arg0: i32) -> (i32, i32) {
    %c0_i32 = arith.constant 0 : i32
    %c0_i32_0 = arith.constant 0 : i32
    return %arg0, %c0_i32 : i32, i32
  }
  func.func @transform_1(%arg0: i32) -> (i32, i32) {
    %c0_i32 = arith.constant 0 : i32
    %c0_i32_0 = arith.constant 0 : i32
    %c0_i32_1 = arith.constant 0 : i32
    return %c0_i32, %c0_i32_0 : i32, i32
  }
  func.func @transform_2(%arg0: i32) -> (i32, i32) {
    %c0_i32 = arith.constant 0 : i32
    %c0_i32_0 = arith.constant 0 : i32
    %c0_i32_1 = arith.constant 0 : i32
    return %c0_i32, %c0_i32_0 : i32, i32
  }
  func.func @transform_3(%arg0: i32) -> (i32, i32) {
    %c0_i32 = arith.constant 0 : i32
    %c0_i32_0 = arith.constant 0 : i32
    %c0_i32_1 = arith.constant 0 : i32
    return %c0_i32, %c0_i32_0 : i32, i32
  }
  func.func @transform_4(%arg0: i32) -> (i32, i32) {
    %c0_i32 = arith.constant 0 : i32
    %c0_i32_0 = arith.constant 0 : i32
    %c0_i32_1 = arith.constant 0 : i32
    return %c0_i32, %c0_i32_0 : i32, i32
  }
  func.func @transform_5(%arg0: i32) -> (i32, i32) {
    %c0_i32 = arith.constant 0 : i32
    %c0_i32_0 = arith.constant 0 : i32
    %c0_i32_1 = arith.constant 0 : i32
    return %c0_i32, %c0_i32_0 : i32, i32
  }
  func.func @transform_6(%arg0: i32) -> (i32, i32) {
    %c0_i32 = arith.constant 0 : i32
    %c0_i32_0 = arith.constant 0 : i32
    %c0_i32_1 = arith.constant 0 : i32
    return %c0_i32, %c0_i32_0 : i32, i32
  }
  func.func @transform_7(%arg0: i32) -> (i32, i32) {
    %c0_i32 = arith.constant 0 : i32
    %c0_i32_0 = arith.constant 0 : i32
    return %arg0, %c0_i32 : i32, i32
  }
}

</mosaic_0001>

<llo_original>
// kernel: dqn_forward.1
$region0: #{dqn_forward.1}
  #allocation0 [shape = 'u32[]', space=smem, size = 0x4, offset = 0x4, fixed_abs, tag = 'smem constant byte address 0x4 - core index']
  #allocation1 [shape = 'u32[144,128]{1,0:T(1,128)}', space=vmem, size = 0x12000, scoped, tag = 'internal scratch']
  %s0 = inlined_call_operand.hbm [shape: f32[8,16], index: 0, kind: input, shape index: {}]
  %s1 = inlined_call_operand.hbm [shape: f32[16,128], index: 1, kind: input, shape index: {}]
  %s2 = inlined_call_operand.vmem [shape: f32[1,128], index: 2, kind: input, shape index: {}]
  %s3 = inlined_call_operand.hbm [shape: f32[128,128], index: 3, kind: input, shape index: {}]
  %s4 = inlined_call_operand.vmem [shape: f32[1,128], index: 4, kind: input, shape index: {}]
  %s5 = inlined_call_operand.hbm [shape: f32[128,128], index: 5, kind: input, shape index: {}]
  %s6 = inlined_call_operand.vmem [shape: f32[1,128], index: 6, kind: input, shape index: {}]
  %s7 = inlined_call_operand.vmem [shape: f32[8,128], index: 7, kind: output, shape index: {}]
  %s8 = sld [smem:[#allocation0]]
  $region54: #{dqn_forward.1} parent=0
    _
  %s10 = ssub.s32 1, %s8
  %s11 = scalar_select 0, %s10, %s8
  $region1: #{dqn_forward.1} parent=0
    #allocation2 [shape = 'u8[4096]{0}', space=vmem, size = 0x1000, scoped, tag = 'input window, operand 0, single buffered']
    #allocation3 [shape = 's32[1]{0}', space=sflag, size = 0x4, scoped, tag = 'scoped memory for dqn_forward.1']
    #allocation4 [shape = 'u8[8192]{0}', space=vmem, size = 0x2000, scoped, tag = 'input window, operand 1, single buffered']
    #allocation5 [shape = 's32[1]{0}', space=sflag, size = 0x4, scoped, tag = 'scoped memory for dqn_forward.1']
    #allocation6 [shape = 'u8[65536]{0}', space=vmem, size = 0x10000, scoped, tag = 'input window, operand 3, single buffered']
    #allocation7 [shape = 'u8[65536]{0}', space=vmem, size = 0x10000, scoped, tag = 'input window, operand 5, single buffered']
    #allocation8 [shape = 's32[1]{0}', space=sflag, size = 0x4, scoped, tag = 'scoped memory for dqn_forward.1']
    %12 = vsyncpa [#allocation3], 0
    %13 = vsyncpa [#allocation5], 0
    %14 = vsyncpa [#allocation8], 0
    // Predicated region
    $region2: #{dqn_forward.1} parent=1 // pred_check
      _
    $region3: #{dqn_forward.1} parent=1 // pred_check_branch
      %16 = sbr.rel (0) target = $region5
    $region4: #{dqn_forward.1} parent=1 // pred_region
      %s18 = ssub.s32 128, 128
      %19 = vsyncadd [#allocation3], %s18
      %s21 = sshll.u32 [#allocation2], 4
      %s22 = int_to_ptr.vmem [resolvable:$true] %s21
      %24 = dma.hbm_to_vmem [thread:$0]  %s0, 128, %s22, [#allocation3]
    $region5: #{dqn_forward.1} parent=1 // pred_fallthru
      _
    // Predicated region
    $region6: #{dqn_forward.1} parent=1 // pred_check
      _
    $region7: #{dqn_forward.1} parent=1 // pred_check_branch
      %26 = sbr.rel (0) target = $region9
    $region8: #{dqn_forward.1} parent=1 // pred_region
      %s28 = ssub.s32 256, 256
      %29 = vsyncadd [#allocation5], %s28
      %s30 = sshll.u32 [#allocation4], 4
      %s31 = int_to_ptr.vmem [resolvable:$true] %s30
      %36 = dma.hbm_to_vmem [thread:$0]  %s1, 256, %s31, [#allocation5], 128, 128, 8
    $region9: #{dqn_forward.1} parent=1 // pred_fallthru
      _
    // Predicated region
    $region10: #{dqn_forward.1} parent=1 // pred_check
      _
    $region11: #{dqn_forward.1} parent=1 // pred_check_branch
      %38 = sbr.rel (0) target = $region13
    $region12: #{dqn_forward.1} parent=1 // pred_region
      _
    $region13: #{dqn_forward.1} parent=1 // pred_fallthru
      _
    // Predicated region
    $region14: #{dqn_forward.1} parent=1 // pred_check
      _
    $region15: #{dqn_forward.1} parent=1 // pred_check_branch
      %40 = sbr.rel (0) target = $region17
    $region16: #{dqn_forward.1} parent=1 // pred_region
      %s42 = ssub.s32 2048, 2048
      %43 = vsyncadd [#allocation5], %s42
      %s44 = sshll.u32 [#allocation6], 4
      %s45 = int_to_ptr.vmem [resolvable:$true] %s44
      %50 = dma.hbm_to_vmem [thread:$0]  %s3, 2048, %s45, [#allocation5], 128, 128, 8
    $region17: #{dqn_forward.1} parent=1 // pred_fallthru
      _
    // Predicated region
    $region18: #{dqn_forward.1} parent=1 // pred_check
      _
    $region19: #{dqn_forward.1} parent=1 // pred_check_branch
      %52 = sbr.rel (0) target = $region21
    $region20: #{dqn_forward.1} parent=1 // pred_region
      _
    $region21: #{dqn_forward.1} parent=1 // pred_fallthru
      _
    // Predicated region
    $region22: #{dqn_forward.1} parent=1 // pred_check
      _
    $region23: #{dqn_forward.1} parent=1 // pred_check_branch
      %54 = sbr.rel (0) target = $region25
    $region24: #{dqn_forward.1} parent=1 // pred_region
      %s56 = ssub.s32 2048, 2048
      %57 = vsyncadd [#allocation8], %s56
      %s58 = sshll.u32 [#allocation7], 4
      %s59 = int_to_ptr.vmem [resolvable:$true] %s58
      %64 = dma.hbm_to_vmem [thread:$0]  %s5, 2048, %s59, [#allocation8], 128, 128, 8
    $region25: #{dqn_forward.1} parent=1 // pred_fallthru
      _
    // Predicated region
    $region26: #{dqn_forward.1} parent=1 // pred_check
      _
    $region27: #{dqn_forward.1} parent=1 // pred_check_branch
      %66 = sbr.rel (0) target = $region29
    $region28: #{dqn_forward.1} parent=1 // pred_region
      _
    $region29: #{dqn_forward.1} parent=1 // pred_fallthru
      _
    // Predicated region
    $region30: #{dqn_forward.1} parent=1 // pred_check
      _
    $region31: #{dqn_forward.1} parent=1 // pred_check_branch
      %68 = sbr.rel (0) target = $region33
    $region32: #{dqn_forward.1} parent=1 // pred_region
      %69 = dma.done [#allocation3], 128
    $region33: #{dqn_forward.1} parent=1 // pred_fallthru
      _
    // Predicated region
    $region34: #{dqn_forward.1} parent=1 // pred_check
      _
    $region35: #{dqn_forward.1} parent=1 // pred_check_branch
      %71 = sbr.rel (0) target = $region37
    $region36: #{dqn_forward.1} parent=1 // pred_region
      %72 = dma.done [#allocation5], 256
    $region37: #{dqn_forward.1} parent=1 // pred_fallthru
      _
    // Predicated region
    $region38: #{dqn_forward.1} parent=1 // pred_check
      _
    $region39: #{dqn_forward.1} parent=1 // pred_check_branch
      %74 = sbr.rel (0) target = $region41
    $region40: #{dqn_forward.1} parent=1 // pred_region
      %75 = dma.done [#allocation5], 2048
    $region41: #{dqn_forward.1} parent=1 // pred_fallthru
      _
    // Predicated region
    $region42: #{dqn_forward.1} parent=1 // pred_check
      _
    $region43: #{dqn_forward.1} parent=1 // pred_check_branch
      %77 = sbr.rel (0) target = $region45
    $region44: #{dqn_forward.1} parent=1 // pred_region
      %78 = dma.done [#allocation8], 2048
    $region45: #{dqn_forward.1} parent=1 // pred_fallthru
      _
    %v79 = vld [vmem:[#allocation2] sm:$0xff]
    %v80 = vld [vmem:[#allocation4] sm:$0xff]
    %v81 = vld [vmem:[#allocation4 + $0x8] sm:$0xff]
    %v82 = vld [vmem:[%s2] sm:$0x1]
    %v84 = vlaneseq
    %v85 = vshrl.u32 %v84, 7
    %v86 = vsub.s32 0, %v85
    %v87 = vrot.slane %v82, %v86
    %vm89 = vcmask 130048
    %v91 = vsel %vm89, %v79, 0
    %93 = vmatprep.subr.mxu0 0.0
    %94 = vmatpush1.msra.mxu0 %v80
    %95 = vmatprep.subr.mxu0 0.0
    %96 = vmatpush1.msra.mxu0 %v81
    %97 = vmatprep.subr.mxu0 0.0
    %98 = vmatpush1.msra.mxu0 0.0
    %99 = vmatprep.subr.mxu0 0.0
    %100 = vmatpush1.msra.mxu0 0.0
    %101 = vmatprep.subr.mxu0 0.0
    %102 = vmatpush1.msra.mxu0 0.0
    %103 = vmatprep.subr.mxu0 0.0
    %104 = vmatpush1.msra.mxu0 0.0
    %105 = vmatprep.subr.mxu0 0.0
    %106 = vmatpush1.msra.mxu0 0.0
    %107 = vmatprep.subr.mxu0 0.0
    %108 = vmatpush1.msra.mxu0 0.0
    %109 = vmatprep.subr.mxu0 0.0
    %110 = vmatpush1.msra.mxu0 0.0
    %111 = vmatprep.subr.mxu0 0.0
    %112 = vmatpush1.msra.mxu0 0.0
    %113 = vmatprep.subr.mxu0 0.0
    %114 = vmatpush1.msra.mxu0 0.0
    %115 = vmatprep.subr.mxu0 0.0
    %116 = vmatpush1.msra.mxu0 0.0
    %117 = vmatprep.subr.mxu0 0.0
    %118 = vmatpush1.msra.mxu0 0.0
    %119 = vmatprep.subr.mxu0 0.0
    %120 = vmatpush1.msra.mxu0 0.0
    %121 = vmatprep.subr.mxu0 0.0
    %122 = vmatpush1.msra.mxu0 0.0
    %123 = vmatprep.subr.mxu0 0.0
    %124 = vmatpush1.msra.mxu0 0.0
    %125 = vmatprep.subr.mxu0 0.0
    %126 = vmatpush1.msra.mxu0 0.0
    %127 = vmatprep.subr.mxu0 0.0
    %128 = vmatpush1.msra.mxu0 0.0
    %129 = vmatprep.subr.mxu0 0.0
    %130 = vmatpush1.msra.mxu0 0.0
    %131 = vmatprep.subr.mxu0 0.0
    %132 = vmatpush1.msra.mxu0 0.0
    %133 = vmatprep.subr.mxu0 0.0
    %134 = vmatpush1.msra.mxu0 0.0
    %135 = vmatprep.subr.mxu0 0.0
    %136 = vmatpush1.msra.mxu0 0.0
    %137 = vmatprep.subr.mxu0 0.0
    %138 = vmatpush1.msra.mxu0 0.0
    %139 = vmatprep.subr.mxu0 0.0
    %140 = vmatpush1.msra.mxu0 0.0
    %141 = vmatprep.subr.mxu0 0.0
    %142 = vmatpush1.msra.mxu0 0.0
    %143 = vmatprep.subr.mxu0 0.0
    %144 = vmatpush1.msra.mxu0 0.0
    %145 = vmatprep.subr.mxu0 0.0
    %146 = vmatpush1.msra.mxu0 0.0
    %147 = vmatprep.subr.mxu0 0.0
    %148 = vmatpush1.msra.mxu0 0.0
    %149 = vmatprep.subr.mxu0 0.0
    %150 = vmatpush1.msra.mxu0 0.0
    %151 = vmatprep.subr.mxu0 0.0
    %152 = vmatpush1.msra.mxu0 0.0
    %153 = vmatprep.subr.mxu0 0.0
    %154 = vmatpush1.msra.mxu0 0.0
    %155 = vmatprep.subr.mxu0 0.0
    %156 = vmatpush1.msra.mxu0 0.0
    %157 = vmatprep.mubr.f32.mxu0 0.0
    %158 = vmatmul.mubr.f32.gmra.mrb[0].mxu0 %v91
    %v159 = vpop.f32.mrb[0].mxu0
    %v160 = vadd.f32 %v87, %v159
    %v161 = vpop.f32.mrb[0].mxu0
    %162 = vdwg.mxu0
    %v163 = vmax.f32 %v160, 0.0
    %v164 = vld [vmem:[#allocation6] sm:$0xff]
    %v165 = vld [vmem:[#allocation6 + $0x8] sm:$0xff]
    %v166 = vld [vmem:[#allocation6 + $0x10] sm:$0xff]
    %v167 = vld [vmem:[#allocation6 + $0x18] sm:$0xff]
    %v168 = vld [vmem:[#allocation6 + $0x20] sm:$0xff]
    %v169 = vld [vmem:[#allocation6 + $0x28] sm:$0xff]
    %v170 = vld [vmem:[#allocation6 + $0x30] sm:$0xff]
    %v171 = vld [vmem:[#allocation6 + $0x38] sm:$0xff]
    %v172 = vld [vmem:[#allocation6 + $0x40] sm:$0xff]
    %v173 = vld [vmem:[#allocation6 + $0x48] sm:$0xff]
    %v174 = vld [vmem:[#allocation6 + $0x50] sm:$0xff]
    %v175 = vld [vmem:[#allocation6 + $0x58] sm:$0xff]
    %v176 = vld [vmem:[#allocation6 + $0x60] sm:$0xff]
    %v177 = vld [vmem:[#allocation6 + $0x68] sm:$0xff]
    %v178 = vld [vmem:[#allocation6 + $0x70] sm:$0xff]
    %v179 = vld [vmem:[#allocation6 + $0x78] sm:$0xff]
    %v180 = vld [vmem:[%s4] sm:$0x1]
    %v182 = vlaneseq
    %v183 = vshrl.u32 %v182, 7
    %v184 = vsub.s32 0, %v183
    %v185 = vrot.slane %v180, %v184
    %187 = vmatprep.subr.mxu0 0.0
    %188 = vmatpush1.msra.mxu0 %v164
    %189 = vmatprep.subr.mxu0 0.0
    %190 = vmatpush1.msra.mxu0 %v165
    %191 = vmatprep.subr.mxu0 0.0
    %192 = vmatpush1.msra.mxu0 %v166
    %193 = vmatprep.subr.mxu0 0.0
    %194 = vmatpush1.msra.mxu0 %v167
    %195 = vmatprep.subr.mxu0 0.0
    %196 = vmatpush1.msra.mxu0 %v168
    %197 = vmatprep.subr.mxu0 0.0
    %198 = vmatpush1.msra.mxu0 %v169
    %199 = vmatprep.subr.mxu0 0.0
    %200 = vmatpush1.msra.mxu0 %v170
    %201 = vmatprep.subr.mxu0 0.0
    %202 = vmatpush1.msra.mxu0 %v171
    %203 = vmatprep.subr.mxu0 0.0
    %204 = vmatpush1.msra.mxu0 %v172
    %205 = vmatprep.subr.mxu0 0.0
    %206 = vmatpush1.msra.mxu0 %v173
    %207 = vmatprep.subr.mxu0 0.0
    %208 = vmatpush1.msra.mxu0 %v174
    %209 = vmatprep.subr.mxu0 0.0
    %210 = vmatpush1.msra.mxu0 %v175
    %211 = vmatprep.subr.mxu0 0.0
    %212 = vmatpush1.msra.mxu0 %v176
    %213 = vmatprep.subr.mxu0 0.0
    %214 = vmatpush1.msra.mxu0 %v177
    %215 = vmatprep.subr.mxu0 0.0
    %216 = vmatpush1.msra.mxu0 %v178
    %217 = vmatprep.subr.mxu0 0.0
    %218 = vmatpush1.msra.mxu0 %v179
    %219 = vmatprep.subr.mxu0 0.0
    %220 = vmatpush1.msra.mxu0 0.0
    %221 = vmatprep.subr.mxu0 0.0
    %222 = vmatpush1.msra.mxu0 0.0
    %223 = vmatprep.subr.mxu0 0.0
    %224 = vmatpush1.msra.mxu0 0.0
    %225 = vmatprep.subr.mxu0 0.0
    %226 = vmatpush1.msra.mxu0 0.0
    %227 = vmatprep.subr.mxu0 0.0
    %228 = vmatpush1.msra.mxu0 0.0
    %229 = vmatprep.subr.mxu0 0.0
    %230 = vmatpush1.msra.mxu0 0.0
    %231 = vmatprep.subr.mxu0 0.0
    %232 = vmatpush1.msra.mxu0 0.0
    %233 = vmatprep.subr.mxu0 0.0
    %234 = vmatpush1.msra.mxu0 0.0
    %235 = vmatprep.subr.mxu0 0.0
    %236 = vmatpush1.msra.mxu0 0.0
    %237 = vmatprep.subr.mxu0 0.0
    %238 = vmatpush1.msra.mxu0 0.0
    %239 = vmatprep.subr.mxu0 0.0
    %240 = vmatpush1.msra.mxu0 0.0
    %241 = vmatprep.subr.mxu0 0.0
    %242 = vmatpush1.msra.mxu0 0.0
    %243 = vmatprep.subr.mxu0 0.0
    %244 = vmatpush1.msra.mxu0 0.0
    %245 = vmatprep.subr.mxu0 0.0
    %246 = vmatpush1.msra.mxu0 0.0
    %247 = vmatprep.subr.mxu0 0.0
    %248 = vmatpush1.msra.mxu0 0.0
    %249 = vmatprep.subr.mxu0 0.0
    %250 = vmatpush1.msra.mxu0 0.0
    %251 = vmatprep.mubr.f32.mxu0 0.0
    %252 = vmatmul.mubr.f32.gmra.mrb[0].mxu0 %v163
    %v253 = vpop.f32.mrb[0].mxu0
    %v254 = vadd.f32 %v185, %v253
    %v255 = vpop.f32.mrb[0].mxu0
    %256 = vdwg.mxu0
    %v257 = vmax.f32 %v254, 0.0
    %v258 = vld [vmem:[#allocation7] sm:$0xff]
    %v259 = vld [vmem:[#allocation7 + $0x8] sm:$0xff]
    %v260 = vld [vmem:[#allocation7 + $0x10] sm:$0xff]
    %v261 = vld [vmem:[#allocation7 + $0x18] sm:$0xff]
    %v262 = vld [vmem:[#allocation7 + $0x20] sm:$0xff]
    %v263 = vld [vmem:[#allocation7 + $0x28] sm:$0xff]
    %v264 = vld [vmem:[#allocation7 + $0x30] sm:$0xff]
    %v265 = vld [vmem:[#allocation7 + $0x38] sm:$0xff]
    %v266 = vld [vmem:[#allocation7 + $0x40] sm:$0xff]
    %v267 = vld [vmem:[#allocation7 + $0x48] sm:$0xff]
    %v268 = vld [vmem:[#allocation7 + $0x50] sm:$0xff]
    %v269 = vld [vmem:[#allocation7 + $0x58] sm:$0xff]
    %v270 = vld [vmem:[#allocation7 + $0x60] sm:$0xff]
    %v271 = vld [vmem:[#allocation7 + $0x68] sm:$0xff]
    %v272 = vld [vmem:[#allocation7 + $0x70] sm:$0xff]
    %v273 = vld [vmem:[#allocation7 + $0x78] sm:$0xff]
    %v274 = vld [vmem:[%s6] sm:$0x1]
    %v276 = vlaneseq
    %v277 = vshrl.u32 %v276, 7
    %v278 = vsub.s32 0, %v277
    %v279 = vrot.slane %v274, %v278
    %281 = vmatprep.subr.mxu0 0.0
    %282 = vmatpush1.msra.mxu0 %v258
    %283 = vmatprep.subr.mxu0 0.0
    %284 = vmatpush1.msra.mxu0 %v259
    %285 = vmatprep.subr.mxu0 0.0
    %286 = vmatpush1.msra.mxu0 %v260
    %287 = vmatprep.subr.mxu0 0.0
    %288 = vmatpush1.msra.mxu0 %v261
    %289 = vmatprep.subr.mxu0 0.0
    %290 = vmatpush1.msra.mxu0 %v262
    %291 = vmatprep.subr.mxu0 0.0
    %292 = vmatpush1.msra.mxu0 %v263
    %293 = vmatprep.subr.mxu0 0.0
    %294 = vmatpush1.msra.mxu0 %v264
    %295 = vmatprep.subr.mxu0 0.0
    %296 = vmatpush1.msra.mxu0 %v265
    %297 = vmatprep.subr.mxu0 0.0
    %298 = vmatpush1.msra.mxu0 %v266
    %299 = vmatprep.subr.mxu0 0.0
    %300 = vmatpush1.msra.mxu0 %v267
    %301 = vmatprep.subr.mxu0 0.0
    %302 = vmatpush1.msra.mxu0 %v268
    %303 = vmatprep.subr.mxu0 0.0
    %304 = vmatpush1.msra.mxu0 %v269
    %305 = vmatprep.subr.mxu0 0.0
    %306 = vmatpush1.msra.mxu0 %v270
    %307 = vmatprep.subr.mxu0 0.0
    %308 = vmatpush1.msra.mxu0 %v271
    %309 = vmatprep.subr.mxu0 0.0
    %310 = vmatpush1.msra.mxu0 %v272
    %311 = vmatprep.subr.mxu0 0.0
    %312 = vmatpush1.msra.mxu0 %v273
    %313 = vmatprep.subr.mxu0 0.0
    %314 = vmatpush1.msra.mxu0 0.0
    %315 = vmatprep.subr.mxu0 0.0
    %316 = vmatpush1.msra.mxu0 0.0
    %317 = vmatprep.subr.mxu0 0.0
    %318 = vmatpush1.msra.mxu0 0.0
    %319 = vmatprep.subr.mxu0 0.0
    %320 = vmatpush1.msra.mxu0 0.0
    %321 = vmatprep.subr.mxu0 0.0
    %322 = vmatpush1.msra.mxu0 0.0
    %323 = vmatprep.subr.mxu0 0.0
    %324 = vmatpush1.msra.mxu0 0.0
    %325 = vmatprep.subr.mxu0 0.0
    %326 = vmatpush1.msra.mxu0 0.0
    %327 = vmatprep.subr.mxu0 0.0
    %328 = vmatpush1.msra.mxu0 0.0
    %329 = vmatprep.subr.mxu0 0.0
    %330 = vmatpush1.msra.mxu0 0.0
    %331 = vmatprep.subr.mxu0 0.0
    %332 = vmatpush1.msra.mxu0 0.0
    %333 = vmatprep.subr.mxu0 0.0
    %334 = vmatpush1.msra.mxu0 0.0
    %335 = vmatprep.subr.mxu0 0.0
    %336 = vmatpush1.msra.mxu0 0.0
    %337 = vmatprep.subr.mxu0 0.0
    %338 = vmatpush1.msra.mxu0 0.0
    %339 = vmatprep.subr.mxu0 0.0
    %340 = vmatpush1.msra.mxu0 0.0
    %341 = vmatprep.subr.mxu0 0.0
    %342 = vmatpush1.msra.mxu0 0.0
    %343 = vmatprep.subr.mxu0 0.0
    %344 = vmatpush1.msra.mxu0 0.0
    %345 = vmatprep.mubr.f32.mxu0 0.0
    %346 = vmatmul.mubr.f32.gmra.mrb[0].mxu0 %v257
    %v347 = vpop.f32.mrb[0].mxu0
    %v348 = vadd.f32 %v279, %v347
    %v349 = vpop.f32.mrb[0].mxu0
    %350 = vdwg.mxu0
    %351 = vst [vmem:[%s7] sm:$0xff] %v348
    // Predicated region
    $region46: #{dqn_forward.1} parent=1 // pred_check
      _
    $region47: #{dqn_forward.1} parent=1 // pred_check_branch
      %353 = sbr.rel (0) target = $region49
    $region48: #{dqn_forward.1} parent=1 // pred_region
      _
    $region49: #{dqn_forward.1} parent=1 // pred_fallthru
      _
    // Predicated region
    $region50: #{dqn_forward.1} parent=1 // pred_check
      _
    $region51: #{dqn_forward.1} parent=1 // pred_check_branch
      %355 = sbr.rel (0) target = $region53
    $region52: #{dqn_forward.1} parent=1 // pred_region
      _
    $region53: #{dqn_forward.1} parent=1 // pred_fallthru
      _
    %356 = vsyncpa [#allocation3], 1
    %357 = vsyncpa [#allocation5], 1
    %358 = vsyncpa [#allocation8], 1

</llo_original>
